<compile_context>
chip_gen: v7x
topology: tpu7x:2x2x1
jax: 0.10.0
libtpu: 0.0.40
codegen_flags: <defaults>
</compile_context>

<pallas_src>
import functools

import jax
import jax.numpy as jnp
from jax.experimental import pallas as pl
from jax.experimental.pallas import tpu as pltpu


# ----------------------------------------------------------------------------
# Fused MLP kernel: (W1 @ xT + b1) -> ELU -> (W2 @ . + b2) -> ELU -> (W3 @ . + b3)
# ----------------------------------------------------------------------------
def _elu(y):
    # ELU(alpha=1): y if y > 0 else exp(y) - 1.  Clamp the exp argument so the
    # discarded branch never produces inf.
    return jnp.where(y > 0, y, jnp.exp(jnp.minimum(y, 0.0)) - 1.0)


def _mlp_kernel(x_ref, w1_ref, b1_ref, w2_ref, b2_ref, w3_ref, b3_ref, o_ref):
    # x_ref : (C0, TM)  activations, transposed (batch in the lane dim)
    # wK_ref: (Ck_out, Ck_in)  torch Linear weight layout
    # bK_ref: (Ck_out, 1)
    # o_ref : (C2, TM)
    h = jnp.dot(w1_ref[...], x_ref[...], preferred_element_type=jnp.float32) + b1_ref[...]
    h = _elu(h)
    h = jnp.dot(w2_ref[...], h, preferred_element_type=jnp.float32) + b2_ref[...]
    h = _elu(h)
    y = jnp.dot(w3_ref[...], h, preferred_element_type=jnp.float32) + b3_ref[...]
    o_ref[...] = y.astype(o_ref.dtype)


def mlp_forward(x, params):
    """x: (M, C0) -> (M, C2), single fused Pallas kernel."""
    w1, b1, w2, b2, w3, b3 = params
    M, C0 = x.shape
    C0o = w1.shape[0]          # = C0
    C1 = w2.shape[0]
    C2 = w3.shape[0]

    # Batch goes into the lane dimension -> lane-dense loads/stores.
    xT = x.T                                   # (C0, M)
    b1c = b1.reshape(C0o, 1)
    b2c = b2.reshape(C1, 1)
    b3c = b3.reshape(C2, 1)

    # Tile only the batch axis; prefer 128-wide lane tiles, otherwise one full block.
    tm = 128 if (M % 128 == 0 and M >= 128) else M
    grid = (M // tm,)

    outT = pl.pallas_call(
        _mlp_kernel,
        out_shape=jax.ShapeDtypeStruct((C2, M), x.dtype),
        grid_spec=pltpu.PrefetchScalarGridSpec(
            num_scalar_prefetch=0,
            grid=grid,
            in_specs=[
                pl.BlockSpec((C0, tm), lambda i: (0, i)),     # xT tile
                pl.BlockSpec((C0o, C0), lambda i: (0, 0)),    # W1
                pl.BlockSpec((C0o, 1), lambda i: (0, 0)),     # b1
                pl.BlockSpec((C1, C0o), lambda i: (0, 0)),    # W2
                pl.BlockSpec((C1, 1), lambda i: (0, 0)),      # b2
                pl.BlockSpec((C2, C1), lambda i: (0, 0)),     # W3
                pl.BlockSpec((C2, 1), lambda i: (0, 0)),      # b3
            ],
            out_specs=pl.BlockSpec((C2, tm), lambda i: (0, i)),
        ),
        compiler_params=pltpu.CompilerParams(
            dimension_semantics=("parallel",)),
    )(xT, w1, b1c, w2, b2c, w3, b3c)

    return outT.T                              # (M, C2)


# ----------------------------------------------------------------------------
# Deterministic parameter init (matches the torch module's shapes / init)
# ----------------------------------------------------------------------------
def init_params(key, channels):
    c0, c1, c2 = channels
    specs = [(c0, c0), (c0, c1), (c1, c2)]     # (in, out) for fc_1, fc_2, fc_3
    ps = []
    for cin, cout in specs:
        key, kw, kb = jax.random.split(key, 3)
        # xavier_normal_ on the (out, in) weight
        std = (2.0 / (cin + cout)) ** 0.5
        w = std * jax.random.normal(kw, (cout, cin), dtype=jnp.float32)
        # torch Linear default bias init: U(-1/sqrt(fan_in), 1/sqrt(fan_in))
        bound = 1.0 / (cin ** 0.5)
        b = jax.random.uniform(kb, (cout,), jnp.float32, -bound, bound)
        ps.append((w, b))
    (w1, b1), (w2, b2), (w3, b3) = ps
    return (w1, b1, w2, b2, w3, b3)


# ----------------------------------------------------------------------------
# Pure-JAX reference (silent sanity check)
# ----------------------------------------------------------------------------
def _reference(x, params):
    w1, b1, w2, b2, w3, b3 = params
    hi = jax.lax.Precision.HIGHEST
    h = _elu(jnp.dot(x, w1.T, precision=hi) + b1)
    h = _elu(jnp.dot(h, w2.T, precision=hi) + b2)
    return jnp.dot(h, w3.T, precision=hi) + b3


if __name__ == "__main__":
    channels = [32, 64, 16]
    batch = 256                                # 2 lane-dense tiles of 128 -> grid=(2,)

    key = jax.random.PRNGKey(0)
    key, kx = jax.random.split(key)
    x = jax.random.normal(kx, (batch, channels[0]), dtype=jnp.float32)
    params = init_params(key, channels)

    fwd = jax.jit(functools.partial(mlp_forward, params=params))
    out = fwd(x)
    jax.block_until_ready(out)

    assert out.shape == (batch, channels[2]), out.shape

    ref = _reference(x, params)
    assert jnp.allclose(out, ref, atol=2e-3, rtol=2e-3), "mismatch vs reference"

    print("KERNEL_OK")
</pallas_src>

<mosaic_0001>
module attributes {stable_mosaic.version = 11 : i64} {
  func.func @_mlp_kernel(%arg0: i32, %arg1: memref<32x128xf32, #tpu.memory_space<vmem>>, %arg2: memref<32x32xf32, #tpu.memory_space<vmem>>, %arg3: memref<32x1xf32, #tpu.memory_space<vmem>>, %arg4: memref<64x32xf32, #tpu.memory_space<vmem>>, %arg5: memref<64x1xf32, #tpu.memory_space<vmem>>, %arg6: memref<16x64xf32, #tpu.memory_space<vmem>>, %arg7: memref<16x1xf32, #tpu.memory_space<vmem>>, %arg8: memref<16x128xf32, #tpu.memory_space<vmem>>) attributes {dimension_semantics = [#tpu.dimension_semantics<parallel>], iteration_bounds = array<i64: 2>, scalar_prefetch = 0 : i64, scratch_operands = 0 : i64, tpu.core_type = #tpu.core_type<tc>, window_params = [{transform_indices = @transform_0, window_bounds = array<i64: 32, 128>}, {pipeline_mode = #tpu.pipeline_mode<synchronous>, transform_indices = @transform_1, window_bounds = array<i64: 32, 32>}, {pipeline_mode = #tpu.pipeline_mode<synchronous>, transform_indices = @transform_2, window_bounds = array<i64: 32, 1>}, {pipeline_mode = #tpu.pipeline_mode<synchronous>, transform_indices = @transform_3, window_bounds = array<i64: 64, 32>}, {pipeline_mode = #tpu.pipeline_mode<synchronous>, transform_indices = @transform_4, window_bounds = array<i64: 64, 1>}, {pipeline_mode = #tpu.pipeline_mode<synchronous>, transform_indices = @transform_5, window_bounds = array<i64: 16, 64>}, {pipeline_mode = #tpu.pipeline_mode<synchronous>, transform_indices = @transform_6, window_bounds = array<i64: 16, 1>}, {transform_indices = @transform_7, window_bounds = array<i64: 16, 128>}]} {
    %c0 = arith.constant 0 : index
    %c0_0 = arith.constant 0 : index
    %0 = vector.load %arg2[%c0, %c0_0] : memref<32x32xf32, #tpu.memory_space<vmem>>, vector<32x32xf32>
    %c0_1 = arith.constant 0 : index
    %c0_2 = arith.constant 0 : index
    %1 = vector.load %arg1[%c0_1, %c0_2] : memref<32x128xf32, #tpu.memory_space<vmem>>, vector<32x128xf32>
    %cst = arith.constant dense<0.000000e+00> : vector<32x128xf32>
    %2 = tpu.matmul %0, %1, %cst {dimension_numbers = #tpu.dot_dimension_numbers<[1], [0], [0], [1], [0, 0, 1, 1], [], []>} : vector<32x32xf32>, vector<32x128xf32>, vector<32x128xf32> -> vector<32x128xf32>
    %c0_3 = arith.constant 0 : index
    %c0_4 = arith.constant 0 : index
    %3 = vector.load %arg3[%c0_3, %c0_4] : memref<32x1xf32, #tpu.memory_space<vmem>>, vector<32x1xf32>
    %4 = vector.broadcast %3 : vector<32x1xf32> to vector<32x128xf32>
    %5 = arith.addf %2, %4 : vector<32x128xf32>
    %cst_5 = arith.constant 0.000000e+00 : f32
    %6 = vector.broadcast %cst_5 : f32 to vector<32x128xf32>
    %7 = arith.cmpf ogt, %5, %6 : vector<32x128xf32>
    %cst_6 = arith.constant 0.000000e+00 : f32
    %8 = vector.broadcast %cst_6 : f32 to vector<32x128xf32>
    %9 = arith.minimumf %5, %8 : vector<32x128xf32>
    %10 = math.exp %9 : vector<32x128xf32>
    %cst_7 = arith.constant 1.000000e+00 : f32
    %11 = vector.broadcast %cst_7 : f32 to vector<32x128xf32>
    %12 = arith.subf %10, %11 : vector<32x128xf32>
    %13 = arith.select %7, %5, %12 : vector<32x128xi1>, vector<32x128xf32>
    %c0_8 = arith.constant 0 : index
    %c0_9 = arith.constant 0 : index
    %14 = vector.load %arg4[%c0_8, %c0_9] : memref<64x32xf32, #tpu.memory_space<vmem>>, vector<64x32xf32>
    %cst_10 = arith.constant dense<0.000000e+00> : vector<64x128xf32>
    %15 = tpu.matmul %14, %13, %cst_10 {dimension_numbers = #tpu.dot_dimension_numbers<[1], [0], [0], [1], [0, 0, 1, 1], [], []>} : vector<64x32xf32>, vector<32x128xf32>, vector<64x128xf32> -> vector<64x128xf32>
    %c0_11 = arith.constant 0 : index
    %c0_12 = arith.constant 0 : index
    %16 = vector.load %arg5[%c0_11, %c0_12] : memref<64x1xf32, #tpu.memory_space<vmem>>, vector<64x1xf32>
    %17 = vector.broadcast %16 : vector<64x1xf32> to vector<64x128xf32>
    %18 = arith.addf %15, %17 : vector<64x128xf32>
    %cst_13 = arith.constant 0.000000e+00 : f32
    %19 = vector.broadcast %cst_13 : f32 to vector<64x128xf32>
    %20 = arith.cmpf ogt, %18, %19 : vector<64x128xf32>
    %cst_14 = arith.constant 0.000000e+00 : f32
    %21 = vector.broadcast %cst_14 : f32 to vector<64x128xf32>
    %22 = arith.minimumf %18, %21 : vector<64x128xf32>
    %23 = math.exp %22 : vector<64x128xf32>
    %cst_15 = arith.constant 1.000000e+00 : f32
    %24 = vector.broadcast %cst_15 : f32 to vector<64x128xf32>
    %25 = arith.subf %23, %24 : vector<64x128xf32>
    %26 = arith.select %20, %18, %25 : vector<64x128xi1>, vector<64x128xf32>
    %c0_16 = arith.constant 0 : index
    %c0_17 = arith.constant 0 : index
    %27 = vector.load %arg6[%c0_16, %c0_17] : memref<16x64xf32, #tpu.memory_space<vmem>>, vector<16x64xf32>
    %cst_18 = arith.constant dense<0.000000e+00> : vector<16x128xf32>
    %28 = tpu.matmul %27, %26, %cst_18 {dimension_numbers = #tpu.dot_dimension_numbers<[1], [0], [0], [1], [0, 0, 1, 1], [], []>} : vector<16x64xf32>, vector<64x128xf32>, vector<16x128xf32> -> vector<16x128xf32>
    %c0_19 = arith.constant 0 : index
    %c0_20 = arith.constant 0 : index
    %29 = vector.load %arg7[%c0_19, %c0_20] : memref<16x1xf32, #tpu.memory_space<vmem>>, vector<16x1xf32>
    %30 = vector.broadcast %29 : vector<16x1xf32> to vector<16x128xf32>
    %31 = arith.addf %28, %30 : vector<16x128xf32>
    %c0_21 = arith.constant 0 : index
    %c0_22 = arith.constant 0 : index
    %32 = vector.load %arg8[%c0_21, %c0_22] : memref<16x128xf32, #tpu.memory_space<vmem>>, vector<16x128xf32>
    tpu.vector_store %arg8[%c0_21, %c0_22], %31 {strides = array<i32>} : memref<16x128xf32, #tpu.memory_space<vmem>>, vector<16x128xf32>,
    return
  }
  func.func @transform_0(%arg0: i32) -> (i32, i32) {
    %c0_i32 = arith.constant 0 : i32
    %c0_i32_0 = arith.constant 0 : i32
    return %c0_i32, %arg0 : i32, i32
  }
  func.func @transform_1(%arg0: i32) -> (i32, i32) {
    %c0_i32 = arith.constant 0 : i32
    %c0_i32_0 = arith.constant 0 : i32
    %c0_i32_1 = arith.constant 0 : i32
    return %c0_i32, %c0_i32_0 : i32, i32
  }
  func.func @transform_2(%arg0: i32) -> (i32, i32) {
    %c0_i32 = arith.constant 0 : i32
    %c0_i32_0 = arith.constant 0 : i32
    %c0_i32_1 = arith.constant 0 : i32
    return %c0_i32, %c0_i32_0 : i32, i32
  }
  func.func @transform_3(%arg0: i32) -> (i32, i32) {
    %c0_i32 = arith.constant 0 : i32
    %c0_i32_0 = arith.constant 0 : i32
    %c0_i32_1 = arith.constant 0 : i32
    return %c0_i32, %c0_i32_0 : i32, i32
  }
  func.func @transform_4(%arg0: i32) -> (i32, i32) {
    %c0_i32 = arith.constant 0 : i32
    %c0_i32_0 = arith.constant 0 : i32
    %c0_i32_1 = arith.constant 0 : i32
    return %c0_i32, %c0_i32_0 : i32, i32
  }
  func.func @transform_5(%arg0: i32) -> (i32, i32) {
    %c0_i32 = arith.constant 0 : i32
    %c0_i32_0 = arith.constant 0 : i32
    %c0_i32_1 = arith.constant 0 : i32
    return %c0_i32, %c0_i32_0 : i32, i32
  }
  func.func @transform_6(%arg0: i32) -> (i32, i32) {
    %c0_i32 = arith.constant 0 : i32
    %c0_i32_0 = arith.constant 0 : i32
    %c0_i32_1 = arith.constant 0 : i32
    return %c0_i32, %c0_i32_0 : i32, i32
  }
  func.func @transform_7(%arg0: i32) -> (i32, i32) {
    %c0_i32 = arith.constant 0 : i32
    %c0_i32_0 = arith.constant 0 : i32
    return %c0_i32, %arg0 : i32, i32
  }
}

</mosaic_0001>

<llo_original>
// kernel: mlp_forward.1
$region0: #{mlp_forward.1}
  #allocation0 [shape = 'u32[]', space=smem, size = 0x4, offset = 0x4, fixed_abs, tag = 'smem constant byte address 0x4 - core index']
  #allocation1 [shape = 'u32[144,128]{1,0:T(1,128)}', space=vmem, size = 0x12000, scoped, tag = 'internal scratch']
  %s0 = inlined_call_operand.hbm [shape: f32[32,256], index: 0, kind: input, shape index: {}]
  %s1 = inlined_call_operand.hbm [shape: f32[32,32], index: 1, kind: input, shape index: {}]
  %s2 = inlined_call_operand.hbm [shape: f32[32,1], index: 2, kind: input, shape index: {}]
  %s3 = inlined_call_operand.hbm [shape: f32[64,32], index: 3, kind: input, shape index: {}]
  %s4 = inlined_call_operand.hbm [shape: f32[64,1], index: 4, kind: input, shape index: {}]
  %s5 = inlined_call_operand.vmem [shape: f32[16,64], index: 5, kind: input, shape index: {}]
  %s6 = inlined_call_operand.hbm [shape: f32[16,1], index: 6, kind: input, shape index: {}]
  %s7 = inlined_call_operand.hbm [shape: f32[16,256], index: 7, kind: output, shape index: {}]
  %s8 = sld [smem:[#allocation0]]
  $region85: #{mlp_forward.1} parent=0
    _
  %s10 = ssub.s32 1, %s8
  %s11 = scalar_select 0, %s10, %s8
  $region1: #{mlp_forward.1} parent=0
    #allocation2 [shape = 'u8[32768]{0}', space=vmem, size = 0x8000, scoped, tag = 'input window, operand 0']
    #allocation3 [shape = 's32[2]{0}', space=sflag, size = 0x8, scoped, tag = 'scoped memory for mlp_forward.1']
    #allocation4 [shape = 's32[2]{0}', space=sflag, size = 0x8, scoped, tag = 'scoped memory for mlp_forward.1']
    #allocation5 [shape = 'u8[16384]{0}', space=vmem, size = 0x4000, scoped, tag = 'input window, operand 1, single buffered']
    #allocation6 [shape = 's32[1]{0}', space=sflag, size = 0x4, scoped, tag = 'scoped memory for mlp_forward.1']
    #allocation7 [shape = 'u8[16384]{0}', space=vmem, size = 0x4000, scoped, tag = 'input window, operand 2, single buffered']
    #allocation8 [shape = 'u8[32768]{0}', space=vmem, size = 0x8000, scoped, tag = 'input window, operand 3, single buffered']
    #allocation9 [shape = 's32[1]{0}', space=sflag, size = 0x4, scoped, tag = 'scoped memory for mlp_forward.1']
    #allocation10 [shape = 'u8[32768]{0}', space=vmem, size = 0x8000, scoped, tag = 'input window, operand 4, single buffered']
    #allocation11 [shape = 'u8[8192]{0}', space=vmem, size = 0x2000, scoped, tag = 'input window, operand 6, single buffered']
    #allocation12 [shape = 's32[1]{0}', space=sflag, size = 0x4, scoped, tag = 'scoped memory for mlp_forward.1']
    #allocation13 [shape = 'u8[16384]{0}', space=vmem, size = 0x4000, scoped, tag = 'output window, operand 0']
    %12 = vsyncpa [#allocation3], 0
    %s13 = scalar_lea.sflag [#allocation3], 1
    %14 = vsyncpa %s13, 0
    %15 = vsyncpa [#allocation6], 0
    %16 = vsyncpa [#allocation9], 0
    %17 = vsyncpa [#allocation12], 0
    %18 = vsyncpa [#allocation4], 0
    %s19 = scalar_lea.sflag [#allocation4], 1
    %20 = vsyncpa %s19, 0
    loop: start=0, step=1, limit=4
    $region2: #{mlp_forward.1} parent=1 // loop_pre_header
      _
    $region3: #{mlp_forward.1} parent=1 // loop_header
      %s22 = sphi 0, %s26
      %p23 = scmp.ge.s32.totalorder %s22, 4
      %s32 = sphi 0, %s34
      %s35 = sphi 0, %s32
      %s36 = sphi 0, %s35
      %s52 = sphi 0, %s36
      %s56 = sphi 0, %s56
      %s58 = sphi 0, %s56
      %s59 = sphi 0, %s58
      %s73 = sphi 0, %s59
      %s77 = sphi 0, %s77
      %s79 = sphi 0, %s77
      %s80 = sphi 0, %s79
      %s94 = sphi 0, %s80
      %s98 = sphi 0, %s98
      %s100 = sphi 0, %s98
      %s101 = sphi 0, %s100
      %s115 = sphi 0, %s101
      %s119 = sphi 0, %s119
      %s121 = sphi 0, %s119
      %s122 = sphi 0, %s121
      %s136 = sphi 0, %s122
      %s140 = sphi 0, %s140
      %s142 = sphi 0, %s140
      %s143 = sphi 0, %s142
      %s157 = sphi 0, %s143
      %s161 = sphi 0, %s161
      %s163 = sphi 0, %s161
      %s164 = sphi 0, %s163
      %s178 = sphi 0, %s164
      %s184 = sphi 0, %s186
      %s187 = sphi 0, %s184
      %s188 = sphi 0, %s187
      %s204 = sphi 0, %s188
    $region4: #{mlp_forward.1} parent=1 // loop_header_branch
      %25 = sbr.rel (%p23) target = $region8
    $region5: #{mlp_forward.1} parent=1 // loop_body
      %s27 = ssub.s32 %s22, 1
      %s28 = ssub.s32 %s22, 2
      %s29 = sadd.s32 %s22, 1
      %s30 = ssub.s32 %s22, %s29
      %p31 = scmp.eq.s32.totalorder %s30, 0
      %s33 = sadd.s32 %s32, 1
      %s34 = scalar_select %p31, %s32, %s33
      %p37 = pneg %p31
      %p38 = scmp.eq.s32.totalorder %s22, 1
      %p39 = por %p37, %p38
      %p40 = scmp.ne.s32.totalorder %s32, %s35
      %p41 = scmp.eq.s32.totalorder %s22, 0
      %p42 = por %p40, %p41
      %p43 = scmp.ne.s32.totalorder %s32, %s35
      %p44 = scmp.eq.s32.totalorder %s27, 1
      %p45 = por %p43, %p44
      %p46 = scmp.ne.s32.totalorder %s35, %s36
      %p47 = scmp.eq.s32.totalorder %s27, 0
      %p48 = por %p46, %p47
      %p49 = scmp.ne.s32.totalorder %s35, %s36
      %p50 = scmp.eq.s32.totalorder %s28, 1
      %p51 = por %p49, %p50
      %p53 = scmp.ne.s32.totalorder %s36, %s52
      %p54 = scmp.eq.s32.totalorder %s28, 0
      %p55 = por %p53, %p54
      %s57 = sadd.s32 %s56, 1
      %p60 = scmp.eq.s32.totalorder %s22, 1
      %p61 = scmp.ne.s32.totalorder %s56, %s58
      %p62 = scmp.eq.s32.totalorder %s22, 0
      %p63 = por %p61, %p62
      %p64 = scmp.ne.s32.totalorder %s56, %s58
      %p65 = scmp.eq.s32.totalorder %s27, 1
      %p66 = por %p64, %p65
      %p67 = scmp.ne.s32.totalorder %s58, %s59
      %p68 = scmp.eq.s32.totalorder %s27, 0
      %p69 = por %p67, %p68
      %p70 = scmp.ne.s32.totalorder %s58, %s59
      %p71 = scmp.eq.s32.totalorder %s28, 1
      %p72 = por %p70, %p71
      %p74 = scmp.ne.s32.totalorder %s59, %s73
      %p75 = scmp.eq.s32.totalorder %s28, 0
      %p76 = por %p74, %p75
      %s78 = sadd.s32 %s77, 1
      %p81 = scmp.eq.s32.totalorder %s22, 1
      %p82 = scmp.ne.s32.totalorder %s77, %s79
      %p83 = scmp.eq.s32.totalorder %s22, 0
      %p84 = por %p82, %p83
      %p85 = scmp.ne.s32.totalorder %s77, %s79
      %p86 = scmp.eq.s32.totalorder %s27, 1
      %p87 = por %p85, %p86
      %p88 = scmp.ne.s32.totalorder %s79, %s80
      %p89 = scmp.eq.s32.totalorder %s27, 0
      %p90 = por %p88, %p89
      %p91 = scmp.ne.s32.totalorder %s79, %s80
      %p92 = scmp.eq.s32.totalorder %s28, 1
      %p93 = por %p91, %p92
      %p95 = scmp.ne.s32.totalorder %s80, %s94
      %p96 = scmp.eq.s32.totalorder %s28, 0
      %p97 = por %p95, %p96
      %s99 = sadd.s32 %s98, 1
      %p102 = scmp.eq.s32.totalorder %s22, 1
      %p103 = scmp.ne.s32.totalorder %s98, %s100
      %p104 = scmp.eq.s32.totalorder %s22, 0
      %p105 = por %p103, %p104
      %p106 = scmp.ne.s32.totalorder %s98, %s100
      %p107 = scmp.eq.s32.totalorder %s27, 1
      %p108 = por %p106, %p107
      %p109 = scmp.ne.s32.totalorder %s100, %s101
      %p110 = scmp.eq.s32.totalorder %s27, 0
      %p111 = por %p109, %p110
      %p112 = scmp.ne.s32.totalorder %s100, %s101
      %p113 = scmp.eq.s32.totalorder %s28, 1
      %p114 = por %p112, %p113
      %p116 = scmp.ne.s32.totalorder %s101, %s115
      %p117 = scmp.eq.s32.totalorder %s28, 0
      %p118 = por %p116, %p117
      %s120 = sadd.s32 %s119, 1
      %p123 = scmp.eq.s32.totalorder %s22, 1
      %p124 = scmp.ne.s32.totalorder %s119, %s121
      %p125 = scmp.eq.s32.totalorder %s22, 0
      %p126 = por %p124, %p125
      %p127 = scmp.ne.s32.totalorder %s119, %s121
      %p128 = scmp.eq.s32.totalorder %s27, 1
      %p129 = por %p127, %p128
      %p130 = scmp.ne.s32.totalorder %s121, %s122
      %p131 = scmp.eq.s32.totalorder %s27, 0
      %p132 = por %p130, %p131
      %p133 = scmp.ne.s32.totalorder %s121, %s122
      %p134 = scmp.eq.s32.totalorder %s28, 1
      %p135 = por %p133, %p134
      %p137 = scmp.ne.s32.totalorder %s122, %s136
      %p138 = scmp.eq.s32.totalorder %s28, 0
      %p139 = por %p137, %p138
      %s141 = sadd.s32 %s140, 1
      %p144 = scmp.eq.s32.totalorder %s22, 1
      %p145 = scmp.ne.s32.totalorder %s140, %s142
      %p146 = scmp.eq.s32.totalorder %s22, 0
      %p147 = por %p145, %p146
      %p148 = scmp.ne.s32.totalorder %s140, %s142
      %p149 = scmp.eq.s32.totalorder %s27, 1
      %p150 = por %p148, %p149
      %p151 = scmp.ne.s32.totalorder %s142, %s143
      %p152 = scmp.eq.s32.totalorder %s27, 0
      %p153 = por %p151, %p152
      %p154 = scmp.ne.s32.totalorder %s142, %s143
      %p155 = scmp.eq.s32.totalorder %s28, 1
      %p156 = por %p154, %p155
      %p158 = scmp.ne.s32.totalorder %s143, %s157
      %p159 = scmp.eq.s32.totalorder %s28, 0
      %p160 = por %p158, %p159
      %s162 = sadd.s32 %s161, 1
      %p165 = scmp.eq.s32.totalorder %s22, 1
      %p166 = scmp.ne.s32.totalorder %s161, %s163
      %p167 = scmp.eq.s32.totalorder %s22, 0
      %p168 = por %p166, %p167
      %p169 = scmp.ne.s32.totalorder %s161, %s163
      %p170 = scmp.eq.s32.totalorder %s27, 1
      %p171 = por %p169, %p170
      %p172 = scmp.ne.s32.totalorder %s163, %s164
      %p173 = scmp.eq.s32.totalorder %s27, 0
      %p174 = por %p172, %p173
      %p175 = scmp.ne.s32.totalorder %s163, %s164
      %p176 = scmp.eq.s32.totalorder %s28, 1
      %p177 = por %p175, %p176
      %p179 = scmp.ne.s32.totalorder %s164, %s178
      %p180 = scmp.eq.s32.totalorder %s28, 0
      %p181 = por %p179, %p180
      %s182 = ssub.s32 %s22, %s29
      %p183 = scmp.eq.s32.totalorder %s182, 0
      %s185 = sadd.s32 %s184, 1
      %s186 = scalar_select %p183, %s184, %s185
      %p189 = pneg %p183
      %p190 = scmp.eq.s32.totalorder %s22, 1
      %p191 = por %p189, %p190
      %p192 = scmp.ne.s32.totalorder %s184, %s187
      %p193 = scmp.eq.s32.totalorder %s22, 0
      %p194 = por %p192, %p193
      %p195 = scmp.ne.s32.totalorder %s184, %s187
      %p196 = scmp.eq.s32.totalorder %s27, 1
      %p197 = por %p195, %p196
      %p198 = scmp.ne.s32.totalorder %s187, %s188
      %p199 = scmp.eq.s32.totalorder %s27, 0
      %p200 = por %p198, %p199
      %p201 = scmp.ne.s32.totalorder %s187, %s188
      %p202 = scmp.eq.s32.totalorder %s28, 1
      %p203 = por %p201, %p202
      %p205 = scmp.ne.s32.totalorder %s188, %s204
      %p206 = scmp.eq.s32.totalorder %s28, 0
      %p207 = por %p205, %p206
      %p208 = scmp.le.s32.totalorder 1, %s22
      %p209 = scmp.lt.s32.totalorder %s22, 3
      %p210 = pnand %p208, %p209
      %p211 = pneg %p210
      // Predicated region
      $region9: #{mlp_forward.1} parent=5 // pred_check
        _
      $region10: #{mlp_forward.1} parent=5 // pred_check_branch
        %213 = sbr.rel (%p210) target = $region12
      $region11: #{mlp_forward.1} parent=5 // pred_region
        %s214 = ssub.s32 %s22, 1
        // Predicated region
        $region13: #{mlp_forward.1} parent=11 // pred_check
          %p215 = pneg %p69
        $region14: #{mlp_forward.1} parent=11 // pred_check_branch
          %217 = sbr.rel (%p215) target = $region16
        $region15: #{mlp_forward.1} parent=11 // pred_region
          %s219 = ssub.s32 512, 512
          %220 = vsyncadd [#allocation6], %s219
          %s221 = sshll.u32 [#allocation5], 4
          %s222 = int_to_ptr.vmem [resolvable:$true] %s221
          %227 = dma.hbm_to_vmem [thread:$0]  %s1, 512, %s222, [#allocation6], 128, 128, 8
        $region16: #{mlp_forward.1} parent=11 // pred_fallthru
          _
        // Predicated region
        $region17: #{mlp_forward.1} parent=11 // pred_check
          %p228 = pneg %p90
        $region18: #{mlp_forward.1} parent=11 // pred_check_branch
          %230 = sbr.rel (%p228) target = $region20
        $region19: #{mlp_forward.1} parent=11 // pred_region
          %s232 = ssub.s32 512, 512
          %233 = vsyncadd [#allocation6], %s232
          %s234 = sshll.u32 [#allocation7], 4
          %s235 = int_to_ptr.vmem [resolvable:$true] %s234
          %240 = dma.hbm_to_vmem [thread:$0]  %s2, 512, %s235, [#allocation6], 128, 128, 8
        $region20: #{mlp_forward.1} parent=11 // pred_fallthru
          _
        // Predicated region
        $region21: #{mlp_forward.1} parent=11 // pred_check
          %p241 = pneg %p111
        $region22: #{mlp_forward.1} parent=11 // pred_check_branch
          %243 = sbr.rel (%p241) target = $region24
        $region23: #{mlp_forward.1} parent=11 // pred_region
          %s245 = ssub.s32 1024, 1024
          %246 = vsyncadd [#allocation9], %s245
          %s247 = sshll.u32 [#allocation8], 4
          %s248 = int_to_ptr.vmem [resolvable:$true] %s247
          %253 = dma.hbm_to_vmem [thread:$0]  %s3, 1024, %s248, [#allocation9], 128, 128, 8
        $region24: #{mlp_forward.1} parent=11 // pred_fallthru
          _
        // Predicated region
        $region25: #{mlp_forward.1} parent=11 // pred_check
          %p254 = pneg %p132
        $region26: #{mlp_forward.1} parent=11 // pred_check_branch
          %256 = sbr.rel (%p254) target = $region28
        $region27: #{mlp_forward.1} parent=11 // pred_region
          %s258 = ssub.s32 1024, 1024
          %259 = vsyncadd [#allocation9], %s258
          %s260 = sshll.u32 [#allocation10], 4
          %s261 = int_to_ptr.vmem [resolvable:$true] %s260
          %266 = dma.hbm_to_vmem [thread:$0]  %s4, 1024, %s261, [#allocation9], 128, 128, 8
        $region28: #{mlp_forward.1} parent=11 // pred_fallthru
          _
        // Predicated region
        $region29: #{mlp_forward.1} parent=11 // pred_check
          %p267 = pneg %p153
        $region30: #{mlp_forward.1} parent=11 // pred_check_branch
          %269 = sbr.rel (%p267) target = $region32
        $region31: #{mlp_forward.1} parent=11 // pred_region
          _
        $region32: #{mlp_forward.1} parent=11 // pred_fallthru
          _
        // Predicated region
        $region33: #{mlp_forward.1} parent=11 // pred_check
          %p270 = pneg %p174
        $region34: #{mlp_forward.1} parent=11 // pred_check_branch
          %272 = sbr.rel (%p270) target = $region36
        $region35: #{mlp_forward.1} parent=11 // pred_region
          %s274 = ssub.s32 256, 256
          %275 = vsyncadd [#allocation12], %s274
          %s276 = sshll.u32 [#allocation11], 4
          %s277 = int_to_ptr.vmem [resolvable:$true] %s276
          %282 = dma.hbm_to_vmem [thread:$0]  %s6, 256, %s277, [#allocation12], 128, 128, 8
        $region36: #{mlp_forward.1} parent=11 // pred_fallthru
          _
      $region12: #{mlp_forward.1} parent=5 // pred_fallthru
        _
      %p283 = scmp.lt.s32.totalorder %s22, 2
      // Predicated region
      $region37: #{mlp_forward.1} parent=5 // pred_check
        %p284 = pneg %p283
      $region38: #{mlp_forward.1} parent=5 // pred_check_branch
        %286 = sbr.rel (%p284) target = $region40
      $region39: #{mlp_forward.1} parent=5 // pred_region
        // Predicated region
        $region41: #{mlp_forward.1} parent=39 // pred_check
          %p287 = pneg %p42
        $region42: #{mlp_forward.1} parent=39 // pred_check_branch
          %289 = sbr.rel (%p287) target = $region44
        $region43: #{mlp_forward.1} parent=39 // pred_region
          %s290 = sand.u32 %s32, 1
          %s291 = scalar_lea.sflag [#allocation3], %s290
          %s292 = sand.u32 %s32, 1
          %s293 = smul.addr %s292, 32
          %s294 = scalar_lea.vmem [#allocation2], %s293
          %s296 = ssub.s32 512, 512
          %297 = vsyncadd %s291, %s296
          %s298 = smul.addr %s22, 128
          %s299 = scalar_lea.hbm %s0, %s298
          %s300 = sshll.u32 %s294, 4
          %s301 = int_to_ptr.vmem [resolvable:$true] %s300
          %306 = dma.hbm_to_vmem [thread:$0]  %s299, 512, %s301, %s291, 256, 128, 8
        $region44: #{mlp_forward.1} parent=39 // pred_fallthru
          _
      $region40: #{mlp_forward.1} parent=5 // pred_fallthru
        _
      %p307 = scmp.le.s32.totalorder 1, %s22
      %p308 = scmp.lt.s32.totalorder %s22, 3
      %p309 = pnand %p307, %p308
      %p310 = pneg %p309
      // Predicated region
      $region45: #{mlp_forward.1} parent=5 // pred_check
        _
      $region46: #{mlp_forward.1} parent=5 // pred_check_branch
        %312 = sbr.rel (%p309) target = $region48
      $region47: #{mlp_forward.1} parent=5 // pred_region
        %s313 = ssub.s32 %s22, 1
        %s314 = sand.u32 %s35, 1
        %s315 = scalar_lea.sflag [#allocation3], %s314
        %s316 = sand.u32 %s35, 1
        %s317 = smul.addr %s316, 32
        %s318 = scalar_lea.vmem [#allocation2], %s317
        // Predicated region
        $region49: #{mlp_forward.1} parent=47 // pred_check
          %p319 = pneg %p48
        $region50: #{mlp_forward.1} parent=47 // pred_check_branch
          %321 = sbr.rel (%p319) target = $region52
        $region51: #{mlp_forward.1} parent=47 // pred_region
          %322 = dma.done %s315, 512
        $region52: #{mlp_forward.1} parent=47 // pred_fallthru
          _
        // Predicated region
        $region53: #{mlp_forward.1} parent=47 // pred_check
          %p323 = pneg %p69
        $region54: #{mlp_forward.1} parent=47 // pred_check_branch
          %325 = sbr.rel (%p323) target = $region56
        $region55: #{mlp_forward.1} parent=47 // pred_region
          %326 = dma.done [#allocation6], 512
        $region56: #{mlp_forward.1} parent=47 // pred_fallthru
          _
        // Predicated region
        $region57: #{mlp_forward.1} parent=47 // pred_check
          %p327 = pneg %p90
        $region58: #{mlp_forward.1} parent=47 // pred_check_branch
          %329 = sbr.rel (%p327) target = $region60
        $region59: #{mlp_forward.1} parent=47 // pred_region
          %330 = dma.done [#allocation6], 512
        $region60: #{mlp_forward.1} parent=47 // pred_fallthru
          _
        // Predicated region
        $region61: #{mlp_forward.1} parent=47 // pred_check
          %p331 = pneg %p111
        $region62: #{mlp_forward.1} parent=47 // pred_check_branch
          %333 = sbr.rel (%p331) target = $region64
        $region63: #{mlp_forward.1} parent=47 // pred_region
          %334 = dma.done [#allocation9], 1024
        $region64: #{mlp_forward.1} parent=47 // pred_fallthru
          _
        // Predicated region
        $region65: #{mlp_forward.1} parent=47 // pred_check
          %p335 = pneg %p132
        $region66: #{mlp_forward.1} parent=47 // pred_check_branch
          %337 = sbr.rel (%p335) target = $region68
        $region67: #{mlp_forward.1} parent=47 // pred_region
          %338 = dma.done [#allocation9], 1024
        $region68: #{mlp_forward.1} parent=47 // pred_fallthru
          _
        // Predicated region
        $region69: #{mlp_forward.1} parent=47 // pred_check
          %p339 = pneg %p174
        $region70: #{mlp_forward.1} parent=47 // pred_check_branch
          %341 = sbr.rel (%p339) target = $region72
        $region71: #{mlp_forward.1} parent=47 // pred_region
          %342 = dma.done [#allocation12], 256
        $region72: #{mlp_forward.1} parent=47 // pred_fallthru
          _
        %s343 = sand.u32 %s35, 1
        %s344 = scalar_lea.sflag [#allocation3], %s343
        %s345 = sand.u32 %s35, 1
        %s346 = smul.addr %s345, 32
        %s347 = scalar_lea.vmem [#allocation2], %s346
        %p348 = pneg %p48
        %p349 = pneg %p45
        %p350 = pneg %p69
        %p351 = pneg %p66
        %p352 = pneg %p90
        %p353 = pneg %p87
        %p354 = pneg %p111
        %p355 = pneg %p108
        %p356 = pneg %p132
        %p357 = pneg %p129
        %p358 = pneg %p153
        %p359 = pneg %p150
        %p360 = pneg %p174
        %p361 = pneg %p171
        %p362 = pneg %p200
        %p363 = pneg %p197
        %s364 = sand.u32 %s187, 1
        %s365 = scalar_lea.sflag [#allocation4], %s364
        %s366 = sand.u32 %s187, 1
        %s367 = smul.addr %s366, 16
        %s368 = scalar_lea.vmem [#allocation13], %s367
        %v369 = vld [vmem:[#allocation5] sm:$0xff]
        %v370 = vld [vmem:[#allocation5 + $0x8] sm:$0xff]
        %v371 = vld [vmem:[#allocation5 + $0x10] sm:$0xff]
        %v372 = vld [vmem:[#allocation5 + $0x18] sm:$0xff]
        %v373 = vld [vmem:[%s318] sm:$0xff]
        %v374 = vld [vmem:[%s318 + $0x8] sm:$0xff]
        %v375 = vld [vmem:[%s318 + $0x10] sm:$0xff]
        %v376 = vld [vmem:[%s318 + $0x18] sm:$0xff]
        %v377 = vld [vmem:[#allocation7] sm:$0xff]
        %v378 = vld [vmem:[#allocation7 + $0x8] sm:$0xff]
        %v379 = vld [vmem:[#allocation7 + $0x10] sm:$0xff]
        %v380 = vld [vmem:[#allocation7 + $0x18] sm:$0xff]
        %382 = vset.pattern.permute.xlu0 0
        %383 = vperm.xlu0 %382, %v377
        %v384 = vpop.permute.xlu0 %383
        %387 = vset.pattern.permute.xlu0 0
        %388 = vperm.xlu0 %387, %v378
        %v389 = vpop.permute.xlu0 %388
        %392 = vset.pattern.permute.xlu0 0
        %393 = vperm.xlu0 %392, %v379
        %v394 = vpop.permute.xlu0 %393
        %397 = vset.pattern.permute.xlu0 0
        %398 = vperm.xlu0 %397, %v380
        %v399 = vpop.permute.xlu0 %398
        %vm401 = vcmask 261120
        %v403 = vsel %vm401, %v369, 0
        %v406 = vsel %vm401, %v370, 0
        %v409 = vsel %vm401, %v371, 0
        %v412 = vsel %vm401, %v372, 0
        %414 = vmatprep.subr.mxu0 0.0
        %415 = vmatpush1.msra.mxu0 %v373
        %416 = vmatprep.subr.mxu0 0.0
        %417 = vmatpush1.msra.mxu0 %v374
        %418 = vmatprep.subr.mxu0 0.0
        %419 = vmatpush1.msra.mxu0 %v375
        %420 = vmatprep.subr.mxu0 0.0
        %421 = vmatpush1.msra.mxu0 %v376
        %422 = vmatprep.subr.mxu0 0.0
        %423 = vmatpush1.msra.mxu0 0.0
        %424 = vmatprep.subr.mxu0 0.0
        %425 = vmatpush1.msra.mxu0 0.0
        %426 = vmatprep.subr.mxu0 0.0
        %427 = vmatpush1.msra.mxu0 0.0
        %428 = vmatprep.subr.mxu0 0.0
        %429 = vmatpush1.msra.mxu0 0.0
        %430 = vmatprep.subr.mxu0 0.0
        %431 = vmatpush1.msra.mxu0 0.0
        %432 = vmatprep.subr.mxu0 0.0
        %433 = vmatpush1.msra.mxu0 0.0
        %434 = vmatprep.subr.mxu0 0.0
        %435 = vmatpush1.msra.mxu0 0.0
        %436 = vmatprep.subr.mxu0 0.0
        %437 = vmatpush1.msra.mxu0 0.0
        %438 = vmatprep.subr.mxu0 0.0
        %439 = vmatpush1.msra.mxu0 0.0
        %440 = vmatprep.subr.mxu0 0.0
        %441 = vmatpush1.msra.mxu0 0.0
        %442 = vmatprep.subr.mxu0 0.0
        %443 = vmatpush1.msra.mxu0 0.0
        %444 = vmatprep.subr.mxu0 0.0
        %445 = vmatpush1.msra.mxu0 0.0
        %446 = vmatprep.subr.mxu0 0.0
        %447 = vmatpush1.msra.mxu0 0.0
        %448 = vmatprep.subr.mxu0 0.0
        %449 = vmatpush1.msra.mxu0 0.0
        %450 = vmatprep.subr.mxu0 0.0
        %451 = vmatpush1.msra.mxu0 0.0
        %452 = vmatprep.subr.mxu0 0.0
        %453 = vmatpush1.msra.mxu0 0.0
        %454 = vmatprep.subr.mxu0 0.0
        %455 = vmatpush1.msra.mxu0 0.0
        %456 = vmatprep.subr.mxu0 0.0
        %457 = vmatpush1.msra.mxu0 0.0
        %458 = vmatprep.subr.mxu0 0.0
        %459 = vmatpush1.msra.mxu0 0.0
        %460 = vmatprep.subr.mxu0 0.0
        %461 = vmatpush1.msra.mxu0 0.0
        %462 = vmatprep.subr.mxu0 0.0
        %463 = vmatpush1.msra.mxu0 0.0
        %464 = vmatprep.subr.mxu0 0.0
        %465 = vmatpush1.msra.mxu0 0.0
        %466 = vmatprep.subr.mxu0 0.0
        %467 = vmatpush1.msra.mxu0 0.0
        %468 = vmatprep.subr.mxu0 0.0
        %469 = vmatpush1.msra.mxu0 0.0
        %470 = vmatprep.subr.mxu0 0.0
        %471 = vmatpush1.msra.mxu0 0.0
        %472 = vmatprep.subr.mxu0 0.0
        %473 = vmatpush1.msra.mxu0 0.0
        %474 = vmatprep.subr.mxu0 0.0
        %475 = vmatpush1.msra.mxu0 0.0
        %476 = vmatprep.subr.mxu0 0.0
        %477 = vmatpush1.msra.mxu0 0.0
        %478 = vmatprep.mubr.f32.mxu0 0.0
        %479 = vmatmul.mubr.f32.gmra.mrb[0].mxu0 %v403
        %v480 = vpop.f32.mrb[0].mxu0
        %v481 = vadd.f32 %v384, %v480
        %v482 = vpop.f32.mrb[0].mxu0
        %483 = vmatprep.mubr.f32.mxu0 0.0
        %484 = vmatmul.mubr.f32.gmra.mrb[0].mxu0 %v406
        %v485 = vpop.f32.mrb[0].mxu0
        %v486 = vadd.f32 %v389, %v485
        %v487 = vpop.f32.mrb[0].mxu0
        %488 = vmatprep.mubr.f32.mxu0 0.0
        %489 = vmatmul.mubr.f32.gmra.mrb[0].mxu0 %v409
        %v490 = vpop.f32.mrb[0].mxu0
        %v491 = vadd.f32 %v394, %v490
        %v492 = vpop.f32.mrb[0].mxu0
        %493 = vmatprep.mubr.f32.mxu0 0.0
        %494 = vmatmul.mubr.f32.gmra.mrb[0].mxu0 %v412
        %v495 = vpop.f32.mrb[0].mxu0
        %v496 = vadd.f32 %v399, %v495
        %v497 = vpop.f32.mrb[0].mxu0
        %498 = vdwg.mxu0
        %vm499 = vcmp.gt.f32.partialorder %v481, 0.0
        %vm500 = vcmp.gt.f32.partialorder %v486, 0.0
        %vm501 = vcmp.gt.f32.partialorder %v491, 0.0
        %vm502 = vcmp.gt.f32.partialorder %v496, 0.0
        %v503 = vmin.f32 %v481, 0.0
        %v504 = vmin.f32 %v486, 0.0
        %v505 = vmin.f32 %v491, 0.0
        %v506 = vmin.f32 %v496, 0.0
        %v507 = vmul.f32 %v503, 1.442695
        %v508 = vpow.pop %v507
        %v509 = vmul.f32 %v504, 1.442695
        %v510 = vpow.pop %v509
        %v511 = vmul.f32 %v505, 1.442695
        %v512 = vpow.pop %v511
        %v513 = vmul.f32 %v506, 1.442695
        %v514 = vpow.pop %v513
        %v515 = vsub.f32 %v508, 1.0
        %v516 = vsub.f32 %v510, 1.0
        %v517 = vsub.f32 %v512, 1.0
        %v518 = vsub.f32 %v514, 1.0
        %v519 = vsel %vm499, %v481, %v515
        %v520 = vsel %vm500, %v486, %v516
        %v521 = vsel %vm501, %v491, %v517
        %v522 = vsel %vm502, %v496, %v518
        %v523 = vld [vmem:[#allocation8] sm:$0xff]
        %v524 = vld [vmem:[#allocation8 + $0x8] sm:$0xff]
        %v525 = vld [vmem:[#allocation8 + $0x10] sm:$0xff]
        %v526 = vld [vmem:[#allocation8 + $0x18] sm:$0xff]
        %v527 = vld [vmem:[#allocation8 + $0x20] sm:$0xff]
        %v528 = vld [vmem:[#allocation8 + $0x28] sm:$0xff]
        %v529 = vld [vmem:[#allocation8 + $0x30] sm:$0xff]
        %v530 = vld [vmem:[#allocation8 + $0x38] sm:$0xff]
        %v531 = vld [vmem:[#allocation10] sm:$0xff]
        %v532 = vld [vmem:[#allocation10 + $0x8] sm:$0xff]
        %v533 = vld [vmem:[#allocation10 + $0x10] sm:$0xff]
        %v534 = vld [vmem:[#allocation10 + $0x18] sm:$0xff]
        %v535 = vld [vmem:[#allocation10 + $0x20] sm:$0xff]
        %v536 = vld [vmem:[#allocation10 + $0x28] sm:$0xff]
        %v537 = vld [vmem:[#allocation10 + $0x30] sm:$0xff]
        %v538 = vld [vmem:[#allocation10 + $0x38] sm:$0xff]
        %540 = vset.pattern.permute.xlu0 0
        %541 = vperm.xlu0 %540, %v531
        %v542 = vpop.permute.xlu0 %541
        %545 = vset.pattern.permute.xlu0 0
        %546 = vperm.xlu0 %545, %v532
        %v547 = vpop.permute.xlu0 %546
        %550 = vset.pattern.permute.xlu0 0
        %551 = vperm.xlu0 %550, %v533
        %v552 = vpop.permute.xlu0 %551
        %555 = vset.pattern.permute.xlu0 0
        %556 = vperm.xlu0 %555, %v534
        %v557 = vpop.permute.xlu0 %556
        %560 = vset.pattern.permute.xlu0 0
        %561 = vperm.xlu0 %560, %v535
        %v562 = vpop.permute.xlu0 %561
        %565 = vset.pattern.permute.xlu0 0
        %566 = vperm.xlu0 %565, %v536
        %v567 = vpop.permute.xlu0 %566
        %570 = vset.pattern.permute.xlu0 0
        %571 = vperm.xlu0 %570, %v537
        %v572 = vpop.permute.xlu0 %571
        %575 = vset.pattern.permute.xlu0 0
        %576 = vperm.xlu0 %575, %v538
        %v577 = vpop.permute.xlu0 %576
        %v580 = vsel %vm401, %v523, 0
        %v583 = vsel %vm401, %v524, 0
        %v586 = vsel %vm401, %v525, 0
        %v589 = vsel %vm401, %v526, 0
        %v592 = vsel %vm401, %v527, 0
        %v595 = vsel %vm401, %v528, 0
        %v598 = vsel %vm401, %v529, 0
        %v601 = vsel %vm401, %v530, 0
        %603 = vmatprep.subr.mxu0 0.0
        %604 = vmatpush1.msra.mxu0 %v519
        %605 = vmatprep.subr.mxu0 0.0
        %606 = vmatpush1.msra.mxu0 %v520
        %607 = vmatprep.subr.mxu0 0.0
        %608 = vmatpush1.msra.mxu0 %v521
        %609 = vmatprep.subr.mxu0 0.0
        %610 = vmatpush1.msra.mxu0 %v522
        %611 = vmatprep.subr.mxu0 0.0
        %612 = vmatpush1.msra.mxu0 0.0
        %613 = vmatprep.subr.mxu0 0.0
        %614 = vmatpush1.msra.mxu0 0.0
        %615 = vmatprep.subr.mxu0 0.0
        %616 = vmatpush1.msra.mxu0 0.0
        %617 = vmatprep.subr.mxu0 0.0
        %618 = vmatpush1.msra.mxu0 0.0
        %619 = vmatprep.subr.mxu0 0.0
        %620 = vmatpush1.msra.mxu0 0.0
        %621 = vmatprep.subr.mxu0 0.0
        %622 = vmatpush1.msra.mxu0 0.0
        %623 = vmatprep.subr.mxu0 0.0
        %624 = vmatpush1.msra.mxu0 0.0
        %625 = vmatprep.subr.mxu0 0.0
        %626 = vmatpush1.msra.mxu0 0.0
        %627 = vmatprep.subr.mxu0 0.0
        %628 = vmatpush1.msra.mxu0 0.0
        %629 = vmatprep.subr.mxu0 0.0
        %630 = vmatpush1.msra.mxu0 0.0
        %631 = vmatprep.subr.mxu0 0.0
        %632 = vmatpush1.msra.mxu0 0.0
        %633 = vmatprep.subr.mxu0 0.0
        %634 = vmatpush1.msra.mxu0 0.0
        %635 = vmatprep.subr.mxu0 0.0
        %636 = vmatpush1.msra.mxu0 0.0
        %637 = vmatprep.subr.mxu0 0.0
        %638 = vmatpush1.msra.mxu0 0.0
        %639 = vmatprep.subr.mxu0 0.0
        %640 = vmatpush1.msra.mxu0 0.0
        %641 = vmatprep.subr.mxu0 0.0
        %642 = vmatpush1.msra.mxu0 0.0
        %643 = vmatprep.subr.mxu0 0.0
        %644 = vmatpush1.msra.mxu0 0.0
        %645 = vmatprep.subr.mxu0 0.0
        %646 = vmatpush1.msra.mxu0 0.0
        %647 = vmatprep.subr.mxu0 0.0
        %648 = vmatpush1.msra.mxu0 0.0
        %649 = vmatprep.subr.mxu0 0.0
        %650 = vmatpush1.msra.mxu0 0.0
        %651 = vmatprep.subr.mxu0 0.0
        %652 = vmatpush1.msra.mxu0 0.0
        %653 = vmatprep.subr.mxu0 0.0
        %654 = vmatpush1.msra.mxu0 0.0
        %655 = vmatprep.subr.mxu0 0.0
        %656 = vmatpush1.msra.mxu0 0.0
        %657 = vmatprep.subr.mxu0 0.0
        %658 = vmatpush1.msra.mxu0 0.0
        %659 = vmatprep.subr.mxu0 0.0
        %660 = vmatpush1.msra.mxu0 0.0
        %661 = vmatprep.subr.mxu0 0.0
        %662 = vmatpush1.msra.mxu0 0.0
        %663 = vmatprep.subr.mxu0 0.0
        %664 = vmatpush1.msra.mxu0 0.0
        %665 = vmatprep.subr.mxu0 0.0
        %666 = vmatpush1.msra.mxu0 0.0
        %667 = vmatprep.mubr.f32.mxu0 0.0
        %668 = vmatmul.mubr.f32.gmra.mrb[0].mxu0 %v580
        %v669 = vpop.f32.mrb[0].mxu0
        %v670 = vadd.f32 %v542, %v669
        %v671 = vpop.f32.mrb[0].mxu0
        %672 = vmatprep.mubr.f32.mxu0 0.0
        %673 = vmatmul.mubr.f32.gmra.mrb[0].mxu0 %v583
        %v674 = vpop.f32.mrb[0].mxu0
        %v675 = vadd.f32 %v547, %v674
        %v676 = vpop.f32.mrb[0].mxu0
        %677 = vmatprep.mubr.f32.mxu0 0.0
        %678 = vmatmul.mubr.f32.gmra.mrb[0].mxu0 %v586
        %v679 = vpop.f32.mrb[0].mxu0
        %v680 = vadd.f32 %v552, %v679
        %v681 = vpop.f32.mrb[0].mxu0
        %682 = vmatprep.mubr.f32.mxu0 0.0
        %683 = vmatmul.mubr.f32.gmra.mrb[0].mxu0 %v589
        %v684 = vpop.f32.mrb[0].mxu0
        %v685 = vadd.f32 %v557, %v684
        %v686 = vpop.f32.mrb[0].mxu0
        %687 = vmatprep.mubr.f32.mxu0 0.0
        %688 = vmatmul.mubr.f32.gmra.mrb[0].mxu0 %v592
        %v689 = vpop.f32.mrb[0].mxu0
        %v690 = vadd.f32 %v562, %v689
        %v691 = vpop.f32.mrb[0].mxu0
        %692 = vmatprep.mubr.f32.mxu0 0.0
        %693 = vmatmul.mubr.f32.gmra.mrb[0].mxu0 %v595
        %v694 = vpop.f32.mrb[0].mxu0
        %v695 = vadd.f32 %v567, %v694
        %v696 = vpop.f32.mrb[0].mxu0
        %697 = vmatprep.mubr.f32.mxu0 0.0
        %698 = vmatmul.mubr.f32.gmra.mrb[0].mxu0 %v598
        %v699 = vpop.f32.mrb[0].mxu0
        %v700 = vadd.f32 %v572, %v699
        %v701 = vpop.f32.mrb[0].mxu0
        %702 = vmatprep.mubr.f32.mxu0 0.0
        %703 = vmatmul.mubr.f32.gmra.mrb[0].mxu0 %v601
        %v704 = vpop.f32.mrb[0].mxu0
        %v705 = vadd.f32 %v577, %v704
        %v706 = vpop.f32.mrb[0].mxu0
        %707 = vdwg.mxu0
        %vm708 = vcmp.gt.f32.partialorder %v670, 0.0
        %vm709 = vcmp.gt.f32.partialorder %v675, 0.0
        %vm710 = vcmp.gt.f32.partialorder %v680, 0.0
        %vm711 = vcmp.gt.f32.partialorder %v685, 0.0
        %vm712 = vcmp.gt.f32.partialorder %v690, 0.0
        %vm713 = vcmp.gt.f32.partialorder %v695, 0.0
        %vm714 = vcmp.gt.f32.partialorder %v700, 0.0
        %vm715 = vcmp.gt.f32.partialorder %v705, 0.0
        %v716 = vmin.f32 %v670, 0.0
        %v717 = vmin.f32 %v675, 0.0
        %v718 = vmin.f32 %v680, 0.0
        %v719 = vmin.f32 %v685, 0.0
        %v720 = vmin.f32 %v690, 0.0
        %v721 = vmin.f32 %v695, 0.0
        %v722 = vmin.f32 %v700, 0.0
        %v723 = vmin.f32 %v705, 0.0
        %v724 = vmul.f32 %v716, 1.442695
        %v725 = vpow.pop %v724
        %v726 = vmul.f32 %v717, 1.442695
        %v727 = vpow.pop %v726
        %v728 = vmul.f32 %v718, 1.442695
        %v729 = vpow.pop %v728
        %v730 = vmul.f32 %v719, 1.442695
        %v731 = vpow.pop %v730
        %v732 = vmul.f32 %v720, 1.442695
        %v733 = vpow.pop %v732
        %v734 = vmul.f32 %v721, 1.442695
        %v735 = vpow.pop %v734
        %v736 = vmul.f32 %v722, 1.442695
        %v737 = vpow.pop %v736
        %v738 = vmul.f32 %v723, 1.442695
        %v739 = vpow.pop %v738
        %v740 = vsub.f32 %v725, 1.0
        %v741 = vsub.f32 %v727, 1.0
        %v742 = vsub.f32 %v729, 1.0
        %v743 = vsub.f32 %v731, 1.0
        %v744 = vsub.f32 %v733, 1.0
        %v745 = vsub.f32 %v735, 1.0
        %v746 = vsub.f32 %v737, 1.0
        %v747 = vsub.f32 %v739, 1.0
        %v748 = vsel %vm708, %v670, %v740
        %v749 = vsel %vm709, %v675, %v741
        %v750 = vsel %vm710, %v680, %v742
        %v751 = vsel %vm711, %v685, %v743
        %v752 = vsel %vm712, %v690, %v744
        %v753 = vsel %vm713, %v695, %v745
        %v754 = vsel %vm714, %v700, %v746
        %v755 = vsel %vm715, %v705, %v747
        %v756 = vld [vmem:[%s5] sm:$0xff]
        %v757 = vld [vmem:[%s5 + $0x8] sm:$0xff]
        %v758 = vld [vmem:[#allocation11] sm:$0xff]
        %v759 = vld [vmem:[#allocation11 + $0x8] sm:$0xff]
        %761 = vset.pattern.permute.xlu0 0
        %762 = vperm.xlu0 %761, %v758
        %v763 = vpop.permute.xlu0 %762
        %766 = vset.pattern.permute.xlu0 0
        %767 = vperm.xlu0 %766, %v759
        %v768 = vpop.permute.xlu0 %767
        %vm770 = vcmask 523264
        %v772 = vsel %vm770, %v756, 0
        %v775 = vsel %vm770, %v757, 0
        %777 = vmatprep.subr.mxu0 0.0
        %778 = vmatpush1.msra.mxu0 %v748
        %779 = vmatprep.subr.mxu0 0.0
        %780 = vmatpush1.msra.mxu0 %v749
        %781 = vmatprep.subr.mxu0 0.0
        %782 = vmatpush1.msra.mxu0 %v750
        %783 = vmatprep.subr.mxu0 0.0
        %784 = vmatpush1.msra.mxu0 %v751
        %785 = vmatprep.subr.mxu0 0.0
        %786 = vmatpush1.msra.mxu0 %v752
        %787 = vmatprep.subr.mxu0 0.0
        %788 = vmatpush1.msra.mxu0 %v753
        %789 = vmatprep.subr.mxu0 0.0
        %790 = vmatpush1.msra.mxu0 %v754
        %791 = vmatprep.subr.mxu0 0.0
        %792 = vmatpush1.msra.mxu0 %v755
        %793 = vmatprep.subr.mxu0 0.0
        %794 = vmatpush1.msra.mxu0 0.0
        %795 = vmatprep.subr.mxu0 0.0
        %796 = vmatpush1.msra.mxu0 0.0
        %797 = vmatprep.subr.mxu0 0.0
        %798 = vmatpush1.msra.mxu0 0.0
        %799 = vmatprep.subr.mxu0 0.0
        %800 = vmatpush1.msra.mxu0 0.0
        %801 = vmatprep.subr.mxu0 0.0
        %802 = vmatpush1.msra.mxu0 0.0
        %803 = vmatprep.subr.mxu0 0.0
        %804 = vmatpush1.msra.mxu0 0.0
        %805 = vmatprep.subr.mxu0 0.0
        %806 = vmatpush1.msra.mxu0 0.0
        %807 = vmatprep.subr.mxu0 0.0
        %808 = vmatpush1.msra.mxu0 0.0
        %809 = vmatprep.subr.mxu0 0.0
        %810 = vmatpush1.msra.mxu0 0.0
        %811 = vmatprep.subr.mxu0 0.0
        %812 = vmatpush1.msra.mxu0 0.0
        %813 = vmatprep.subr.mxu0 0.0
        %814 = vmatpush1.msra.mxu0 0.0
        %815 = vmatprep.subr.mxu0 0.0
        %816 = vmatpush1.msra.mxu0 0.0
        %817 = vmatprep.subr.mxu0 0.0
        %818 = vmatpush1.msra.mxu0 0.0
        %819 = vmatprep.subr.mxu0 0.0
        %820 = vmatpush1.msra.mxu0 0.0
        %821 = vmatprep.subr.mxu0 0.0
        %822 = vmatpush1.msra.mxu0 0.0
        %823 = vmatprep.subr.mxu0 0.0
        %824 = vmatpush1.msra.mxu0 0.0
        %825 = vmatprep.subr.mxu0 0.0
        %826 = vmatpush1.msra.mxu0 0.0
        %827 = vmatprep.subr.mxu0 0.0
        %828 = vmatpush1.msra.mxu0 0.0
        %829 = vmatprep.subr.mxu0 0.0
        %830 = vmatpush1.msra.mxu0 0.0
        %831 = vmatprep.subr.mxu0 0.0
        %832 = vmatpush1.msra.mxu0 0.0
        %833 = vmatprep.subr.mxu0 0.0
        %834 = vmatpush1.msra.mxu0 0.0
        %835 = vmatprep.subr.mxu0 0.0
        %836 = vmatpush1.msra.mxu0 0.0
        %837 = vmatprep.subr.mxu0 0.0
        %838 = vmatpush1.msra.mxu0 0.0
        %839 = vmatprep.subr.mxu0 0.0
        %840 = vmatpush1.msra.mxu0 0.0
        %841 = vmatprep.mubr.f32.mxu0 0.0
        %842 = vmatmul.mubr.f32.gmra.mrb[0].mxu0 %v772
        %v843 = vpop.f32.mrb[0].mxu0
        %v844 = vadd.f32 %v763, %v843
        %v845 = vpop.f32.mrb[0].mxu0
        %846 = vmatprep.mubr.f32.mxu0 0.0
        %847 = vmatmul.mubr.f32.gmra.mrb[0].mxu0 %v775
        %v848 = vpop.f32.mrb[0].mxu0
        %v849 = vadd.f32 %v768, %v848
        %v850 = vpop.f32.mrb[0].mxu0
        %851 = vdwg.mxu0
        %852 = vst [vmem:[%s368] sm:$0xff] %v844
        %853 = vst [vmem:[%s368 + $0x8] sm:$0xff] %v849
        %s854 = sand.u32 %s187, 1
        %s855 = scalar_lea.sflag [#allocation4], %s854
        %s856 = sand.u32 %s187, 1
        %s857 = smul.addr %s856, 16
        %s858 = scalar_lea.vmem [#allocation13], %s857
        // Predicated region
        $region73: #{mlp_forward.1} parent=47 // pred_check
          %p859 = pneg %p197
        $region74: #{mlp_forward.1} parent=47 // pred_check_branch
          %861 = sbr.rel (%p859) target = $region76
        $region75: #{mlp_forward.1} parent=47 // pred_region
          %s863 = ssub.s32 256, 256
          %864 = vsyncadd %s855, %s863
          %s865 = smul.addr %s27, 128
          %s866 = scalar_lea.hbm %s7, %s865
          %s867 = sshll.u32 %s858, 4
          %s868 = int_to_ptr.vmem [resolvable:$true] %s867
          %873 = dma.vmem_to_hbm [thread:$0]  %s868, 256, %s866, %s855, 128, 256, 8
        $region76: #{mlp_forward.1} parent=47 // pred_fallthru
          _
      $region48: #{mlp_forward.1} parent=5 // pred_fallthru
        _
      %p874 = scmp.le.s32.totalorder 2, %s22
      // Predicated region
      $region77: #{mlp_forward.1} parent=5 // pred_check
        %p875 = pneg %p874
      $region78: #{mlp_forward.1} parent=5 // pred_check_branch
        %877 = sbr.rel (%p875) target = $region80
      $region79: #{mlp_forward.1} parent=5 // pred_region
        %s878 = ssub.s32 %s22, 2
        // Predicated region
        $region81: #{mlp_forward.1} parent=79 // pred_check
          %p879 = pneg %p203
        $region82: #{mlp_forward.1} parent=79 // pred_check_branch
          %881 = sbr.rel (%p879) target = $region84
        $region83: #{mlp_forward.1} parent=79 // pred_region
          %s882 = sand.u32 %s188, 1
          %s883 = scalar_lea.sflag [#allocation4], %s882
          %s884 = sand.u32 %s188, 1
          %s885 = smul.addr %s884, 16
          %s886 = scalar_lea.vmem [#allocation13], %s885
          %887 = dma.done %s883, 256
        $region84: #{mlp_forward.1} parent=79 // pred_fallthru
          _
      $region80: #{mlp_forward.1} parent=5 // pred_fallthru
        _
    $region6: #{mlp_forward.1} parent=1 // loop_footer
      %s26 = sadd.s32 1, %s22
    $region7: #{mlp_forward.1} parent=1 // loop_footer_branch
      %21 = sbr.rel target = $region3
    $region8: #{mlp_forward.1} parent=1 // loop_exit
      _
    %888 = vsyncpa [#allocation3], 1
    %s889 = scalar_lea.sflag [#allocation3], 1
    %890 = vsyncpa %s889, 1
    %891 = vsyncpa [#allocation6], 1
    %892 = vsyncpa [#allocation9], 1
    %893 = vsyncpa [#allocation12], 1
    %894 = vsyncpa [#allocation4], 1
    %s895 = scalar_lea.sflag [#allocation4], 1
    %896 = vsyncpa %s895, 1

</llo_original>
